<compile_context>
chip_gen: v7x
topology: tpu7x:2x2x1
jax: 0.10.0
libtpu: 0.0.40
codegen_flags: <defaults>
</compile_context>

<pallas_src>
import jax
import jax.numpy as jnp
from jax.experimental import pallas as pl
from jax.experimental.pallas import tpu as pltpu

BN_EPS = 1e-5


def _round_up(n, m):
    return ((n + m - 1) // m) * m


def vqvae_kernel(x_ref, w1_ref, w2e_ref, vec_ref, out_ref):
    H = w1_ref.shape[1]
    K = w2e_ref.shape[1]

    # ---- Linear(1000 -> H); bf16 operands, f32 accumulate. b1 omitted: a per-feature
    # bias added before training-mode BN cancels exactly with the batch-mean subtraction.
    x = x_ref[...].astype(jnp.bfloat16)                                 # (B, 1000)
    h = jnp.dot(x, w1_ref[...], preferred_element_type=jnp.float32)     # (B, H) f32

    # ---- packed per-feature vectors: [gamma; beta; b2@emb^T - 0.5*||e||^2] (3, P) ----
    vec = vec_ref[...]
    gamma = vec[0:1, :H]
    beta = vec[1:2, :H]
    bias_k = vec[2:3, :K]

    # ---- BatchNorm1d (training mode: biased batch stats) ----
    mean = jnp.mean(h, axis=0, keepdims=True)                           # (1, H)
    hc = h - mean                                                       # hoisted, reused
    var = jnp.mean(hc * hc, axis=0, keepdims=True)
    h = hc * jax.lax.rsqrt(var + BN_EPS) * gamma + beta

    # ---- ReLU ----
    h = jnp.maximum(h, 0.0)

    # ---- fused Linear(H -> D) + codebook dot:  score = relu_h @ (W2@emb^T) + bias_k ----
    # argmin_k ||z - e_k||^2 == argmax_k (z.e_k - 0.5*||e_k||^2): the ||z||^2 term is a
    # per-row constant and drops out of the argmin; z itself is never materialized.
    score = jnp.dot(h.astype(jnp.bfloat16), w2e_ref[...],
                    preferred_element_type=jnp.float32) + bias_k        # (B, K)

    # first-occurrence tie-break (matches torch.argmin)
    max_s = jnp.max(score, axis=1, keepdims=True)                       # (B, 1)
    lane_k = jax.lax.broadcasted_iota(jnp.int32, score.shape, 1)        # (B, K)
    cand = jnp.where(score == max_s, lane_k, K)                         # non-max -> K (large)
    idx = jnp.min(cand, axis=1, keepdims=True)                          # (B, 1)

    # lane-dense one-hot over the padded output width (pad lanes are 0 since idx < K)
    lane_full = jax.lax.broadcasted_iota(jnp.int32, out_ref.shape, 1)   # (B, K_pad)
    out_ref[...] = (lane_full == idx).astype(jnp.int32)


def prepare_kernel_params(params):
    """One-time (per-weights) prep: bf16 weights, folded W2@emb^T, packed small vectors."""
    w1, b1, gamma, beta, w2, b2, emb = params
    del b1  # cancels with the training-mode BatchNorm mean subtraction
    H = w1.shape[1]
    K = emb.shape[0]
    P = _round_up(max(H, K), 128)

    emb_f = jnp.asarray(emb, jnp.float32)                               # (K, D)
    w2e = jnp.asarray(w2, jnp.float32) @ emb_f.T                        # (H, K), exact in f32
    bias_k = (jnp.asarray(b2, jnp.float32).reshape(1, -1) @ emb_f.T
              - 0.5 * jnp.sum(emb_f * emb_f, axis=1)[None, :])          # (1, K)

    def pad_row(v):
        v = jnp.asarray(v, jnp.float32).reshape(1, -1)
        return jnp.pad(v, ((0, 0), (0, P - v.shape[1])))

    vec = jnp.concatenate([pad_row(gamma), pad_row(beta), pad_row(bias_k)], axis=0)  # (3, P)

    return (w1.astype(jnp.bfloat16),          # (1000, H)
            w2e.astype(jnp.bfloat16),         # (H, K)   folded second-linear + codebook
            vec)                              # (3, P)   f32


def vqvae_forward(x, kparams):
    w1, w2e, vec = kparams
    B = x.shape[0]
    K = w2e.shape[1]
    K_pad = _round_up(K, 128)                 # lane-dense output, sliced back below
    vmem = pl.BlockSpec(memory_space=pltpu.MemorySpace.VMEM)

    out_pad = pl.pallas_call(
        vqvae_kernel,
        out_shape=jax.ShapeDtypeStruct((B, K_pad), jnp.int32),
        in_specs=[vmem] * 4,
        out_specs=vmem,
    )(x, w1, w2e, vec)

    return out_pad[:, :K] if K_pad != K else out_pad


def vqvae_reference_dist(x, params):
    """Pure-JAX f32 reference distances (matches the torch module, incl. b1)."""
    w1, b1, gamma, beta, w2, b2, emb = params
    h = x @ w1 + b1
    mean = jnp.mean(h, axis=0, keepdims=True)
    var = jnp.mean((h - mean) ** 2, axis=0, keepdims=True)
    h = (h - mean) / jnp.sqrt(var + BN_EPS) * gamma + beta
    h = jnp.maximum(h, 0.0)
    z = h @ w2 + b2
    dist = (jnp.sum(z * z, axis=1, keepdims=True)
            + jnp.sum(emb * emb, axis=1)
            - 2.0 * (z @ emb.T))
    return dist


def make_params(key, hidden_channels, embedding_dim, num_embeddings, in_dim=1000):
    k1, k2, k3, k4, k5 = jax.random.split(key, 5)
    w1 = jax.random.normal(k1, (in_dim, hidden_channels), jnp.float32) * 0.02
    b1 = jax.random.normal(k2, (1, hidden_channels), jnp.float32) * 0.02
    gamma = jnp.ones((1, hidden_channels), jnp.float32)   # BatchNorm1d default init
    beta = jnp.zeros((1, hidden_channels), jnp.float32)
    w2 = jax.random.normal(k3, (hidden_channels, embedding_dim), jnp.float32) * 0.05
    b2 = jax.random.normal(k4, (1, embedding_dim), jnp.float32) * 0.05
    emb = jax.random.normal(k5, (num_embeddings, embedding_dim), jnp.float32)  # nn.Embedding ~ N(0,1)
    return (w1, b1, gamma, beta, w2, b2, emb)


if __name__ == "__main__":
    B, IN_DIM = 8, 1000
    HIDDEN, EMB_DIM, NUM_EMB = 32, 16, 64

    key = jax.random.PRNGKey(0)
    kx, kp = jax.random.split(key)
    x = jax.random.normal(kx, (B, IN_DIM), jnp.float32)
    params = make_params(kp, HIDDEN, EMB_DIM, NUM_EMB, IN_DIM)
    kparams = prepare_kernel_params(params)

    out = jax.block_until_ready(vqvae_forward(x, kparams))

    # structural checks: valid int32 one-hot of the right shape
    assert out.shape == (B, NUM_EMB) and out.dtype == jnp.int32
    assert bool(jnp.all(jnp.sum(out, axis=1) == 1))

    # Tolerance-aware argmin check: bf16 matmuls + the algebraic distance rewrite are not
    # bit-exact, so near-ties may legitimately flip. Require the kernel-chosen code's true
    # (f32 reference) distance to be within a small tolerance of the true minimum.
    dist = vqvae_reference_dist(x, params)
    kernel_idx = jnp.argmax(out, axis=1)
    min_d = jnp.min(dist, axis=1)
    chosen_d = jnp.take_along_axis(dist, kernel_idx[:, None], axis=1)[:, 0]
    tol = 5e-2 * (1.0 + jnp.abs(min_d))
    assert bool(jnp.all(chosen_d <= min_d + tol)), \
        "Pallas VQ index not within tolerance of reference argmin"

    print("KERNEL_OK")
</pallas_src>

<mosaic_0001>
module attributes {stable_mosaic.version = 11 : i64} {
  func.func @vqvae_kernel(%arg0: memref<8x1000xf32, #tpu.memory_space<vmem>>, %arg1: memref<1000x32xbf16, #tpu.memory_space<vmem>>, %arg2: memref<32x64xbf16, #tpu.memory_space<vmem>>, %arg3: memref<3x128xf32, #tpu.memory_space<vmem>>, %arg4: memref<8x128xi32, #tpu.memory_space<vmem>>) attributes {dimension_semantics = [], scalar_prefetch = 0 : i64, scratch_operands = 0 : i64, tpu.core_type = #tpu.core_type<tc>} {
    %c0 = arith.constant 0 : index
    %c0_0 = arith.constant 0 : index
    %0 = vector.load %arg0[%c0, %c0_0] : memref<8x1000xf32, #tpu.memory_space<vmem>>, vector<8x1000xf32>
    %1 = arith.truncf %0 : vector<8x1000xf32> to vector<8x1000xbf16>
    %c0_1 = arith.constant 0 : index
    %c0_2 = arith.constant 0 : index
    %2 = vector.load %arg1[%c0_1, %c0_2] : memref<1000x32xbf16, #tpu.memory_space<vmem>>, vector<1000x32xbf16>
    %cst = arith.constant dense<0.000000e+00> : vector<8x32xf32>
    %3 = tpu.matmul %1, %2, %cst {dimension_numbers = #tpu.dot_dimension_numbers<[1], [0], [0], [1], [0, 0, 1, 1], [], []>} : vector<8x1000xbf16>, vector<1000x32xbf16>, vector<8x32xf32> -> vector<8x32xf32>
    %c0_3 = arith.constant 0 : index
    %c0_4 = arith.constant 0 : index
    %4 = vector.load %arg3[%c0_3, %c0_4] : memref<3x128xf32, #tpu.memory_space<vmem>>, vector<3x128xf32>
    %5 = vector.extract_strided_slice %4 {offsets = [0, 0], sizes = [1, 32], strides = [1, 1]} : vector<3x128xf32> to vector<1x32xf32>
    %6 = vector.extract_strided_slice %4 {offsets = [1, 0], sizes = [1, 32], strides = [1, 1]} : vector<3x128xf32> to vector<1x32xf32>
    %7 = vector.extract_strided_slice %4 {offsets = [2, 0], sizes = [1, 64], strides = [1, 1]} : vector<3x128xf32> to vector<1x64xf32>
    %cst_5 = arith.constant dense<0.000000e+00> : vector<32xf32>
    %8 = vector.multi_reduction <add>, %3, %cst_5 [0] : vector<8x32xf32> to vector<32xf32>
    %9 = vector.shape_cast %8 : vector<32xf32> to vector<1x32xf32>
    %cst_6 = arith.constant 8.000000e+00 : f32
    %10 = vector.broadcast %cst_6 : f32 to vector<1x32xf32>
    %11 = arith.divf %9, %10 : vector<1x32xf32>
    %12 = vector.broadcast %11 : vector<1x32xf32> to vector<8x32xf32>
    %13 = arith.subf %3, %12 : vector<8x32xf32>
    %14 = arith.mulf %13, %13 : vector<8x32xf32>
    %cst_7 = arith.constant dense<0.000000e+00> : vector<32xf32>
    %15 = vector.multi_reduction <add>, %14, %cst_7 [0] : vector<8x32xf32> to vector<32xf32>
    %16 = vector.shape_cast %15 : vector<32xf32> to vector<1x32xf32>
    %cst_8 = arith.constant 8.000000e+00 : f32
    %17 = vector.broadcast %cst_8 : f32 to vector<1x32xf32>
    %18 = arith.divf %16, %17 : vector<1x32xf32>
    %cst_9 = arith.constant 9.99999974E-6 : f32
    %19 = vector.broadcast %cst_9 : f32 to vector<1x32xf32>
    %20 = arith.addf %18, %19 : vector<1x32xf32>
    %21 = math.rsqrt %20 : vector<1x32xf32>
    %22 = vector.broadcast %21 : vector<1x32xf32> to vector<8x32xf32>
    %23 = arith.mulf %13, %22 : vector<8x32xf32>
    %24 = vector.broadcast %5 : vector<1x32xf32> to vector<8x32xf32>
    %25 = arith.mulf %23, %24 : vector<8x32xf32>
    %26 = vector.broadcast %6 : vector<1x32xf32> to vector<8x32xf32>
    %27 = arith.addf %25, %26 : vector<8x32xf32>
    %cst_10 = arith.constant 0.000000e+00 : f32
    %28 = vector.broadcast %cst_10 : f32 to vector<8x32xf32>
    %29 = arith.maximumf %27, %28 : vector<8x32xf32>
    %30 = arith.truncf %29 : vector<8x32xf32> to vector<8x32xbf16>
    %c0_11 = arith.constant 0 : index
    %c0_12 = arith.constant 0 : index
    %31 = vector.load %arg2[%c0_11, %c0_12] : memref<32x64xbf16, #tpu.memory_space<vmem>>, vector<32x64xbf16>
    %cst_13 = arith.constant dense<0.000000e+00> : vector<8x64xf32>
    %32 = tpu.matmul %30, %31, %cst_13 {dimension_numbers = #tpu.dot_dimension_numbers<[1], [0], [0], [1], [0, 0, 1, 1], [], []>} : vector<8x32xbf16>, vector<32x64xbf16>, vector<8x64xf32> -> vector<8x64xf32>
    %33 = vector.broadcast %7 : vector<1x64xf32> to vector<8x64xf32>
    %34 = arith.addf %32, %33 : vector<8x64xf32>
    %cst_14 = arith.constant dense<0xFF800000> : vector<8xf32>
    %35 = vector.multi_reduction <maximumf>, %34, %cst_14 [1] : vector<8x64xf32> to vector<8xf32>
    %36 = vector.shape_cast %35 : vector<8xf32> to vector<8x1xf32>
    %37 = tpu.iota {dimensions = array<i32: 1>} : vector<8x64xi32>
    %38 = vector.broadcast %36 : vector<8x1xf32> to vector<8x64xf32>
    %39 = arith.cmpf oeq, %34, %38 : vector<8x64xf32>
    %c64_i32 = arith.constant 64 : i32
    %40 = vector.broadcast %c64_i32 : i32 to vector<8x64xi32>
    %41 = arith.select %39, %37, %40 : vector<8x64xi1>, vector<8x64xi32>
    %cst_15 = arith.constant dense<2147483647> : vector<8xi32>
    %42 = vector.multi_reduction <minsi>, %41, %cst_15 [1] : vector<8x64xi32> to vector<8xi32>
    %43 = vector.shape_cast %42 : vector<8xi32> to vector<8x1xi32>
    %44 = tpu.iota {dimensions = array<i32: 1>} : vector<8x128xi32>
    %45 = vector.broadcast %43 : vector<8x1xi32> to vector<8x128xi32>
    %46 = arith.cmpi eq, %44, %45 : vector<8x128xi32>
    %47 = arith.extui %46 : vector<8x128xi1> to vector<8x128xi32>
    %c0_16 = arith.constant 0 : index
    %c0_17 = arith.constant 0 : index
    %48 = vector.load %arg4[%c0_16, %c0_17] : memref<8x128xi32, #tpu.memory_space<vmem>>, vector<8x128xi32>
    tpu.vector_store %arg4[%c0_16, %c0_17], %47 {strides = array<i32>} : memref<8x128xi32, #tpu.memory_space<vmem>>, vector<8x128xi32>,
    return
  }
}

</mosaic_0001>

<llo_original>
// kernel: tpu_custom_call.1
$region0: #{tpu_custom_call.1}
  #allocation0 [shape = 'u32[]', space=smem, size = 0x4, offset = 0x4, fixed_abs, tag = 'smem constant byte address 0x4 - core index']
  #allocation1 [shape = 'u32[144,128]{1,0:T(1,128)}', space=vmem, size = 0x12000, scoped, tag = 'internal scratch']
  %s0 = inlined_call_operand.vmem [shape: f32[8,1000], index: 0, kind: input, shape index: {}]
  %s1 = inlined_call_operand.vmem [shape: bf16[1000,32], index: 1, kind: input, shape index: {}]
  %s2 = inlined_call_operand.vmem [shape: bf16[32,64], index: 2, kind: input, shape index: {}]
  %s3 = inlined_call_operand.vmem [shape: f32[3,128], index: 3, kind: input, shape index: {}]
  %s4 = inlined_call_operand.hbm [shape: s32[8,128], index: 4, kind: output, shape index: {}]
  %s5 = sld [smem:[#allocation0]]
  $region26: #{tpu_custom_call.1} parent=0
    _
  %s7 = ssub.s32 1, %s5
  %s8 = scalar_select 0, %s7, %s5
  $region1: #{tpu_custom_call.1} parent=0
    #allocation2 [shape = 'u8[4096]{0}', space=vmem, size = 0x1000, scoped, tag = 'output window, operand 0, single buffered']
    #allocation3 [shape = 's32[1]{0}', space=sflag, size = 0x4, scoped, tag = 'scoped memory for tpu_custom_call.1']
    %9 = vsyncpa [#allocation3], 0
    // Predicated region
    $region2: #{tpu_custom_call.1} parent=1 // pred_check
      _
    $region3: #{tpu_custom_call.1} parent=1 // pred_check_branch
      %11 = sbr.rel (0) target = $region5
    $region4: #{tpu_custom_call.1} parent=1 // pred_region
      _
    $region5: #{tpu_custom_call.1} parent=1 // pred_fallthru
      _
    // Predicated region
    $region6: #{tpu_custom_call.1} parent=1 // pred_check
      _
    $region7: #{tpu_custom_call.1} parent=1 // pred_check_branch
      %13 = sbr.rel (0) target = $region9
    $region8: #{tpu_custom_call.1} parent=1 // pred_region
      _
    $region9: #{tpu_custom_call.1} parent=1 // pred_fallthru
      _
    // Predicated region
    $region10: #{tpu_custom_call.1} parent=1 // pred_check
      _
    $region11: #{tpu_custom_call.1} parent=1 // pred_check_branch
      %15 = sbr.rel (0) target = $region13
    $region12: #{tpu_custom_call.1} parent=1 // pred_region
      _
    $region13: #{tpu_custom_call.1} parent=1 // pred_fallthru
      _
    // Predicated region
    $region14: #{tpu_custom_call.1} parent=1 // pred_check
      _
    $region15: #{tpu_custom_call.1} parent=1 // pred_check_branch
      %17 = sbr.rel (0) target = $region17
    $region16: #{tpu_custom_call.1} parent=1 // pred_region
      _
    $region17: #{tpu_custom_call.1} parent=1 // pred_fallthru
      _
    %v19 = vld [vmem:[%s0] sm:$0xff]
    %v20 = vld [vmem:[%s0 + $0x8] sm:$0xff]
    %v21 = vld [vmem:[%s0 + $0x10] sm:$0xff]
    %v22 = vld [vmem:[%s0 + $0x18] sm:$0xff]
    %v23 = vld [vmem:[%s0 + $0x20] sm:$0xff]
    %v24 = vld [vmem:[%s0 + $0x28] sm:$0xff]
    %v25 = vld [vmem:[%s0 + $0x30] sm:$0xff]
    %v26 = vld [vmem:[%s0 + $0x38] sm:$0xff]
    %v27 = vpack.c.bf16 %v19, %v19
    %v28 = vpack.c.bf16 %v20, %v20
    %v29 = vpack.c.bf16 %v21, %v21
    %v30 = vpack.c.bf16 %v22, %v22
    %v31 = vpack.c.bf16 %v23, %v23
    %v32 = vpack.c.bf16 %v24, %v24
    %v33 = vpack.c.bf16 %v25, %v25
    %v34 = vpack.c.bf16 %v26, %v26
    %v35 = vld [vmem:[%s1] sm:$0xf]
    %v36 = vld [vmem:[%s1 + $0x4] sm:$0xf]
    %v37 = vld [vmem:[%s1 + $0x8] sm:$0xf]
    %v38 = vld [vmem:[%s1 + $0xc] sm:$0xf]
    %v39 = vld [vmem:[%s1 + $0x10] sm:$0xf]
    %v40 = vld [vmem:[%s1 + $0x14] sm:$0xf]
    %v41 = vld [vmem:[%s1 + $0x18] sm:$0xf]
    %v42 = vld [vmem:[%s1 + $0x1c] sm:$0xf]
    %v43 = vld [vmem:[%s1 + $0x20] sm:$0xf]
    %v44 = vld [vmem:[%s1 + $0x24] sm:$0xf]
    %v45 = vld [vmem:[%s1 + $0x28] sm:$0xf]
    %v46 = vld [vmem:[%s1 + $0x2c] sm:$0xf]
    %v47 = vld [vmem:[%s1 + $0x30] sm:$0xf]
    %v48 = vld [vmem:[%s1 + $0x34] sm:$0xf]
    %v49 = vld [vmem:[%s1 + $0x38] sm:$0xf]
    %v50 = vld [vmem:[%s1 + $0x3c] sm:$0xf]
    %v51 = vld [vmem:[%s1 + $0x40] sm:$0xf]
    %v52 = vld [vmem:[%s1 + $0x44] sm:$0xf]
    %v53 = vld [vmem:[%s1 + $0x48] sm:$0xf]
    %v54 = vld [vmem:[%s1 + $0x4c] sm:$0xf]
    %v55 = vld [vmem:[%s1 + $0x50] sm:$0xf]
    %v56 = vld [vmem:[%s1 + $0x54] sm:$0xf]
    %v57 = vld [vmem:[%s1 + $0x58] sm:$0xf]
    %v58 = vld [vmem:[%s1 + $0x5c] sm:$0xf]
    %v59 = vld [vmem:[%s1 + $0x60] sm:$0xf]
    %v60 = vld [vmem:[%s1 + $0x64] sm:$0xf]
    %v61 = vld [vmem:[%s1 + $0x68] sm:$0xf]
    %v62 = vld [vmem:[%s1 + $0x6c] sm:$0xf]
    %v63 = vld [vmem:[%s1 + $0x70] sm:$0xf]
    %v64 = vld [vmem:[%s1 + $0x74] sm:$0xf]
    %v65 = vld [vmem:[%s1 + $0x78] sm:$0xf]
    %v66 = vld [vmem:[%s1 + $0x7c] sm:$0xf]
    %v67 = vld [vmem:[%s1 + $0x80] sm:$0xf]
    %v68 = vld [vmem:[%s1 + $0x84] sm:$0xf]
    %v69 = vld [vmem:[%s1 + $0x88] sm:$0xf]
    %v70 = vld [vmem:[%s1 + $0x8c] sm:$0xf]
    %v71 = vld [vmem:[%s1 + $0x90] sm:$0xf]
    %v72 = vld [vmem:[%s1 + $0x94] sm:$0xf]
    %v73 = vld [vmem:[%s1 + $0x98] sm:$0xf]
    %v74 = vld [vmem:[%s1 + $0x9c] sm:$0xf]
    %v75 = vld [vmem:[%s1 + $0xa0] sm:$0xf]
    %v76 = vld [vmem:[%s1 + $0xa4] sm:$0xf]
    %v77 = vld [vmem:[%s1 + $0xa8] sm:$0xf]
    %v78 = vld [vmem:[%s1 + $0xac] sm:$0xf]
    %v79 = vld [vmem:[%s1 + $0xb0] sm:$0xf]
    %v80 = vld [vmem:[%s1 + $0xb4] sm:$0xf]
    %v81 = vld [vmem:[%s1 + $0xb8] sm:$0xf]
    %v82 = vld [vmem:[%s1 + $0xbc] sm:$0xf]
    %v83 = vld [vmem:[%s1 + $0xc0] sm:$0xf]
    %v84 = vld [vmem:[%s1 + $0xc4] sm:$0xf]
    %v85 = vld [vmem:[%s1 + $0xc8] sm:$0xf]
    %v86 = vld [vmem:[%s1 + $0xcc] sm:$0xf]
    %v87 = vld [vmem:[%s1 + $0xd0] sm:$0xf]
    %v88 = vld [vmem:[%s1 + $0xd4] sm:$0xf]
    %v89 = vld [vmem:[%s1 + $0xd8] sm:$0xf]
    %v90 = vld [vmem:[%s1 + $0xdc] sm:$0xf]
    %v91 = vld [vmem:[%s1 + $0xe0] sm:$0xf]
    %v92 = vld [vmem:[%s1 + $0xe4] sm:$0xf]
    %v93 = vld [vmem:[%s1 + $0xe8] sm:$0xf]
    %v94 = vld [vmem:[%s1 + $0xec] sm:$0xf]
    %v95 = vld [vmem:[%s1 + $0xf0] sm:$0xf]
    %v96 = vld [vmem:[%s1 + $0xf4] sm:$0xf]
    %v97 = vld [vmem:[%s1 + $0xf8] sm:$0xf]
    %v98 = vld [vmem:[%s1 + $0xfc] sm:$0xf]
    %v99 = vld [vmem:[%s1 + $0x100] sm:$0xf]
    %v100 = vld [vmem:[%s1 + $0x104] sm:$0xf]
    %v101 = vld [vmem:[%s1 + $0x108] sm:$0xf]
    %v102 = vld [vmem:[%s1 + $0x10c] sm:$0xf]
    %v103 = vld [vmem:[%s1 + $0x110] sm:$0xf]
    %v104 = vld [vmem:[%s1 + $0x114] sm:$0xf]
    %v105 = vld [vmem:[%s1 + $0x118] sm:$0xf]
    %v106 = vld [vmem:[%s1 + $0x11c] sm:$0xf]
    %v107 = vld [vmem:[%s1 + $0x120] sm:$0xf]
    %v108 = vld [vmem:[%s1 + $0x124] sm:$0xf]
    %v109 = vld [vmem:[%s1 + $0x128] sm:$0xf]
    %v110 = vld [vmem:[%s1 + $0x12c] sm:$0xf]
    %v111 = vld [vmem:[%s1 + $0x130] sm:$0xf]
    %v112 = vld [vmem:[%s1 + $0x134] sm:$0xf]
    %v113 = vld [vmem:[%s1 + $0x138] sm:$0xf]
    %v114 = vld [vmem:[%s1 + $0x13c] sm:$0xf]
    %v115 = vld [vmem:[%s1 + $0x140] sm:$0xf]
    %v116 = vld [vmem:[%s1 + $0x144] sm:$0xf]
    %v117 = vld [vmem:[%s1 + $0x148] sm:$0xf]
    %v118 = vld [vmem:[%s1 + $0x14c] sm:$0xf]
    %v119 = vld [vmem:[%s1 + $0x150] sm:$0xf]
    %v120 = vld [vmem:[%s1 + $0x154] sm:$0xf]
    %v121 = vld [vmem:[%s1 + $0x158] sm:$0xf]
    %v122 = vld [vmem:[%s1 + $0x15c] sm:$0xf]
    %v123 = vld [vmem:[%s1 + $0x160] sm:$0xf]
    %v124 = vld [vmem:[%s1 + $0x164] sm:$0xf]
    %v125 = vld [vmem:[%s1 + $0x168] sm:$0xf]
    %v126 = vld [vmem:[%s1 + $0x16c] sm:$0xf]
    %v127 = vld [vmem:[%s1 + $0x170] sm:$0xf]
    %v128 = vld [vmem:[%s1 + $0x174] sm:$0xf]
    %v129 = vld [vmem:[%s1 + $0x178] sm:$0xf]
    %v130 = vld [vmem:[%s1 + $0x17c] sm:$0xf]
    %v131 = vld [vmem:[%s1 + $0x180] sm:$0xf]
    %v132 = vld [vmem:[%s1 + $0x184] sm:$0xf]
    %v133 = vld [vmem:[%s1 + $0x188] sm:$0xf]
    %v134 = vld [vmem:[%s1 + $0x18c] sm:$0xf]
    %v135 = vld [vmem:[%s1 + $0x190] sm:$0xf]
    %v136 = vld [vmem:[%s1 + $0x194] sm:$0xf]
    %v137 = vld [vmem:[%s1 + $0x198] sm:$0xf]
    %v138 = vld [vmem:[%s1 + $0x19c] sm:$0xf]
    %v139 = vld [vmem:[%s1 + $0x1a0] sm:$0xf]
    %v140 = vld [vmem:[%s1 + $0x1a4] sm:$0xf]
    %v141 = vld [vmem:[%s1 + $0x1a8] sm:$0xf]
    %v142 = vld [vmem:[%s1 + $0x1ac] sm:$0xf]
    %v143 = vld [vmem:[%s1 + $0x1b0] sm:$0xf]
    %v144 = vld [vmem:[%s1 + $0x1b4] sm:$0xf]
    %v145 = vld [vmem:[%s1 + $0x1b8] sm:$0xf]
    %v146 = vld [vmem:[%s1 + $0x1bc] sm:$0xf]
    %v147 = vld [vmem:[%s1 + $0x1c0] sm:$0xf]
    %v148 = vld [vmem:[%s1 + $0x1c4] sm:$0xf]
    %v149 = vld [vmem:[%s1 + $0x1c8] sm:$0xf]
    %v150 = vld [vmem:[%s1 + $0x1cc] sm:$0xf]
    %v151 = vld [vmem:[%s1 + $0x1d0] sm:$0xf]
    %v152 = vld [vmem:[%s1 + $0x1d4] sm:$0xf]
    %v153 = vld [vmem:[%s1 + $0x1d8] sm:$0xf]
    %v154 = vld [vmem:[%s1 + $0x1dc] sm:$0xf]
    %v155 = vld [vmem:[%s1 + $0x1e0] sm:$0xf]
    %v156 = vld [vmem:[%s1 + $0x1e4] sm:$0xf]
    %v157 = vld [vmem:[%s1 + $0x1e8] sm:$0xf]
    %v158 = vld [vmem:[%s1 + $0x1ec] sm:$0xf]
    %v159 = vld [vmem:[%s1 + $0x1f0] sm:$0xf]
    %v285 = vunpack.c.l.b16 %v35
    %v286 = vunpack.c.l.b16 %v36
    %v287 = vunpack.c.l.b16 %v37
    %v288 = vunpack.c.l.b16 %v38
    %v289 = vunpack.c.l.b16 %v39
    %v290 = vunpack.c.l.b16 %v40
    %v291 = vunpack.c.l.b16 %v41
    %v292 = vunpack.c.l.b16 %v42
    %v293 = vunpack.c.l.b16 %v43
    %v294 = vunpack.c.l.b16 %v44
    %v295 = vunpack.c.l.b16 %v45
    %v296 = vunpack.c.l.b16 %v46
    %v297 = vunpack.c.l.b16 %v47
    %v298 = vunpack.c.l.b16 %v48
    %v299 = vunpack.c.l.b16 %v49
    %v300 = vunpack.c.l.b16 %v50
    %v301 = vunpack.c.l.b16 %v51
    %v302 = vunpack.c.l.b16 %v52
    %v303 = vunpack.c.l.b16 %v53
    %v304 = vunpack.c.l.b16 %v54
    %v305 = vunpack.c.l.b16 %v55
    %v306 = vunpack.c.l.b16 %v56
    %v307 = vunpack.c.l.b16 %v57
    %v308 = vunpack.c.l.b16 %v58
    %v309 = vunpack.c.l.b16 %v59
    %v310 = vunpack.c.l.b16 %v60
    %v311 = vunpack.c.l.b16 %v61
    %v312 = vunpack.c.l.b16 %v62
    %v313 = vunpack.c.l.b16 %v63
    %v314 = vunpack.c.l.b16 %v64
    %v315 = vunpack.c.l.b16 %v65
    %v316 = vunpack.c.l.b16 %v66
    %v317 = vunpack.c.l.b16 %v67
    %v318 = vunpack.c.l.b16 %v68
    %v319 = vunpack.c.l.b16 %v69
    %v320 = vunpack.c.l.b16 %v70
    %v321 = vunpack.c.l.b16 %v71
    %v322 = vunpack.c.l.b16 %v72
    %v323 = vunpack.c.l.b16 %v73
    %v324 = vunpack.c.l.b16 %v74
    %v325 = vunpack.c.l.b16 %v75
    %v326 = vunpack.c.l.b16 %v76
    %v327 = vunpack.c.l.b16 %v77
    %v328 = vunpack.c.l.b16 %v78
    %v329 = vunpack.c.l.b16 %v79
    %v330 = vunpack.c.l.b16 %v80
    %v331 = vunpack.c.l.b16 %v81
    %v332 = vunpack.c.l.b16 %v82
    %v333 = vunpack.c.l.b16 %v83
    %v334 = vunpack.c.l.b16 %v84
    %v335 = vunpack.c.l.b16 %v85
    %v336 = vunpack.c.l.b16 %v86
    %v337 = vunpack.c.l.b16 %v87
    %v338 = vunpack.c.l.b16 %v88
    %v339 = vunpack.c.l.b16 %v89
    %v340 = vunpack.c.l.b16 %v90
    %v341 = vunpack.c.l.b16 %v91
    %v342 = vunpack.c.l.b16 %v92
    %v343 = vunpack.c.l.b16 %v93
    %v344 = vunpack.c.l.b16 %v94
    %v345 = vunpack.c.l.b16 %v95
    %v346 = vunpack.c.l.b16 %v96
    %v347 = vunpack.c.l.b16 %v97
    %v348 = vunpack.c.l.b16 %v98
    %v349 = vunpack.c.l.b16 %v99
    %v350 = vunpack.c.l.b16 %v100
    %v351 = vunpack.c.l.b16 %v101
    %v352 = vunpack.c.l.b16 %v102
    %v353 = vunpack.c.l.b16 %v103
    %v354 = vunpack.c.l.b16 %v104
    %v355 = vunpack.c.l.b16 %v105
    %v356 = vunpack.c.l.b16 %v106
    %v357 = vunpack.c.l.b16 %v107
    %v358 = vunpack.c.l.b16 %v108
    %v359 = vunpack.c.l.b16 %v109
    %v360 = vunpack.c.l.b16 %v110
    %v361 = vunpack.c.l.b16 %v111
    %v362 = vunpack.c.l.b16 %v112
    %v363 = vunpack.c.l.b16 %v113
    %v364 = vunpack.c.l.b16 %v114
    %v365 = vunpack.c.l.b16 %v115
    %v366 = vunpack.c.l.b16 %v116
    %v367 = vunpack.c.l.b16 %v117
    %v368 = vunpack.c.l.b16 %v118
    %v369 = vunpack.c.l.b16 %v119
    %v370 = vunpack.c.l.b16 %v120
    %v371 = vunpack.c.l.b16 %v121
    %v372 = vunpack.c.l.b16 %v122
    %v373 = vunpack.c.l.b16 %v123
    %v374 = vunpack.c.l.b16 %v124
    %v375 = vunpack.c.l.b16 %v125
    %v376 = vunpack.c.l.b16 %v126
    %v377 = vunpack.c.l.b16 %v127
    %v378 = vunpack.c.l.b16 %v128
    %v379 = vunpack.c.l.b16 %v129
    %v380 = vunpack.c.l.b16 %v130
    %v381 = vunpack.c.l.b16 %v131
    %v382 = vunpack.c.l.b16 %v132
    %v383 = vunpack.c.l.b16 %v133
    %v384 = vunpack.c.l.b16 %v134
    %v385 = vunpack.c.l.b16 %v135
    %v386 = vunpack.c.l.b16 %v136
    %v387 = vunpack.c.l.b16 %v137
    %v388 = vunpack.c.l.b16 %v138
    %v389 = vunpack.c.l.b16 %v139
    %v390 = vunpack.c.l.b16 %v140
    %v391 = vunpack.c.l.b16 %v141
    %v392 = vunpack.c.l.b16 %v142
    %v393 = vunpack.c.l.b16 %v143
    %v394 = vunpack.c.l.b16 %v144
    %v395 = vunpack.c.l.b16 %v145
    %v396 = vunpack.c.l.b16 %v146
    %v397 = vunpack.c.l.b16 %v147
    %v398 = vunpack.c.l.b16 %v148
    %v399 = vunpack.c.l.b16 %v149
    %v400 = vunpack.c.l.b16 %v150
    %v401 = vunpack.c.l.b16 %v151
    %v402 = vunpack.c.l.b16 %v152
    %v403 = vunpack.c.l.b16 %v153
    %v404 = vunpack.c.l.b16 %v154
    %v405 = vunpack.c.l.b16 %v155
    %v406 = vunpack.c.l.b16 %v156
    %v407 = vunpack.c.l.b16 %v157
    %v408 = vunpack.c.l.b16 %v158
    %v409 = vunpack.c.l.b16 %v159
    %v410 = vpack.c.b16 %v286, %v285
    %v411 = vpack.c.b16 %v288, %v287
    %v412 = vpack.c.b16 %v290, %v289
    %v413 = vpack.c.b16 %v292, %v291
    %v414 = vpack.c.b16 %v294, %v293
    %v415 = vpack.c.b16 %v296, %v295
    %v416 = vpack.c.b16 %v298, %v297
    %v417 = vpack.c.b16 %v300, %v299
    %v418 = vpack.c.b16 %v302, %v301
    %v419 = vpack.c.b16 %v304, %v303
    %v420 = vpack.c.b16 %v306, %v305
    %v421 = vpack.c.b16 %v308, %v307
    %v422 = vpack.c.b16 %v310, %v309
    %v423 = vpack.c.b16 %v312, %v311
    %v424 = vpack.c.b16 %v314, %v313
    %v425 = vpack.c.b16 %v316, %v315
    %v426 = vpack.c.b16 %v318, %v317
    %v427 = vpack.c.b16 %v320, %v319
    %v428 = vpack.c.b16 %v322, %v321
    %v429 = vpack.c.b16 %v324, %v323
    %v430 = vpack.c.b16 %v326, %v325
    %v431 = vpack.c.b16 %v328, %v327
    %v432 = vpack.c.b16 %v330, %v329
    %v433 = vpack.c.b16 %v332, %v331
    %v434 = vpack.c.b16 %v334, %v333
    %v435 = vpack.c.b16 %v336, %v335
    %v436 = vpack.c.b16 %v338, %v337
    %v437 = vpack.c.b16 %v340, %v339
    %v438 = vpack.c.b16 %v342, %v341
    %v439 = vpack.c.b16 %v344, %v343
    %v440 = vpack.c.b16 %v346, %v345
    %v441 = vpack.c.b16 %v348, %v347
    %v442 = vpack.c.b16 %v350, %v349
    %v443 = vpack.c.b16 %v352, %v351
    %v444 = vpack.c.b16 %v354, %v353
    %v445 = vpack.c.b16 %v356, %v355
    %v446 = vpack.c.b16 %v358, %v357
    %v447 = vpack.c.b16 %v360, %v359
    %v448 = vpack.c.b16 %v362, %v361
    %v449 = vpack.c.b16 %v364, %v363
    %v450 = vpack.c.b16 %v366, %v365
    %v451 = vpack.c.b16 %v368, %v367
    %v452 = vpack.c.b16 %v370, %v369
    %v453 = vpack.c.b16 %v372, %v371
    %v454 = vpack.c.b16 %v374, %v373
    %v455 = vpack.c.b16 %v376, %v375
    %v456 = vpack.c.b16 %v378, %v377
    %v457 = vpack.c.b16 %v380, %v379
    %v458 = vpack.c.b16 %v382, %v381
    %v459 = vpack.c.b16 %v384, %v383
    %v460 = vpack.c.b16 %v386, %v385
    %v461 = vpack.c.b16 %v388, %v387
    %v462 = vpack.c.b16 %v390, %v389
    %v463 = vpack.c.b16 %v392, %v391
    %v464 = vpack.c.b16 %v394, %v393
    %v465 = vpack.c.b16 %v396, %v395
    %v466 = vpack.c.b16 %v398, %v397
    %v467 = vpack.c.b16 %v400, %v399
    %v468 = vpack.c.b16 %v402, %v401
    %v469 = vpack.c.b16 %v404, %v403
    %v470 = vpack.c.b16 %v406, %v405
    %v471 = vpack.c.b16 %v408, %v407
    %v472 = vpack.c.b16 %v409, %v409
    %vm535 = vcmask 850944
    %v537 = vsel %vm535, %v34, 0
    %vm539 = vcmask 1043456
    %v541 = vsel %vm539, %v472, 0
    %543 = vmatprep.subr.bf16.mxu0 0
    %544 = vmatpush1.bf16.msra.mxu0 %v410
    %545 = vmatprep.subr.bf16.mxu0 0
    %546 = vmatpush1.bf16.msra.mxu0 %v411
    %547 = vmatprep.subr.bf16.mxu0 0
    %548 = vmatpush1.bf16.msra.mxu0 %v412
    %549 = vmatprep.subr.bf16.mxu0 0
    %550 = vmatpush1.bf16.msra.mxu0 %v413
    %551 = vmatprep.subr.bf16.mxu0 0
    %552 = vmatpush1.bf16.msra.mxu0 %v414
    %553 = vmatprep.subr.bf16.mxu0 0
    %554 = vmatpush1.bf16.msra.mxu0 %v415
    %555 = vmatprep.subr.bf16.mxu0 0
    %556 = vmatpush1.bf16.msra.mxu0 %v416
    %557 = vmatprep.subr.bf16.mxu0 0
    %558 = vmatpush1.bf16.msra.mxu0 %v417
    %559 = vmatprep.subr.bf16.mxu0 0
    %560 = vmatpush1.bf16.msra.mxu0 %v418
    %561 = vmatprep.subr.bf16.mxu0 0
    %562 = vmatpush1.bf16.msra.mxu0 %v419
    %563 = vmatprep.subr.bf16.mxu0 0
    %564 = vmatpush1.bf16.msra.mxu0 %v420
    %565 = vmatprep.subr.bf16.mxu0 0
    %566 = vmatpush1.bf16.msra.mxu0 %v421
    %567 = vmatprep.subr.bf16.mxu0 0
    %568 = vmatpush1.bf16.msra.mxu0 %v422
    %569 = vmatprep.subr.bf16.mxu0 0
    %570 = vmatpush1.bf16.msra.mxu0 %v423
    %571 = vmatprep.subr.bf16.mxu0 0
    %572 = vmatpush1.bf16.msra.mxu0 %v424
    %573 = vmatprep.subr.bf16.mxu0 0
    %574 = vmatpush1.bf16.msra.mxu0 %v425
    %575 = vmatprep.mubr.bf16.mxu0 %v28
    %576 = vmatmul.mubr.bf16.gmra.mrb[0].mxu0 %v27
    %v577 = vpop.f32.mrb[0].mxu0
    %v578 = vadd.f32 0.0, %v577
    %v579 = vpop.f32.mrb[0].mxu0
    %v580 = vpop.f32.mrb[0].mxu0
    %v581 = vpop.f32.mrb[0].mxu0
    %582 = vdwg.mxu0
    %583 = vmatprep.subr.bf16.mxu0 0
    %584 = vmatpush1.bf16.msra.mxu0 %v426
    %585 = vmatprep.subr.bf16.mxu0 0
    %586 = vmatpush1.bf16.msra.mxu0 %v427
    %587 = vmatprep.subr.bf16.mxu0 0
    %588 = vmatpush1.bf16.msra.mxu0 %v428
    %589 = vmatprep.subr.bf16.mxu0 0
    %590 = vmatpush1.bf16.msra.mxu0 %v429
    %591 = vmatprep.subr.bf16.mxu0 0
    %592 = vmatpush1.bf16.msra.mxu0 %v430
    %593 = vmatprep.subr.bf16.mxu0 0
    %594 = vmatpush1.bf16.msra.mxu0 %v431
    %595 = vmatprep.subr.bf16.mxu0 0
    %596 = vmatpush1.bf16.msra.mxu0 %v432
    %597 = vmatprep.subr.bf16.mxu0 0
    %598 = vmatpush1.bf16.msra.mxu0 %v433
    %599 = vmatprep.subr.bf16.mxu0 0
    %600 = vmatpush1.bf16.msra.mxu0 %v434
    %601 = vmatprep.subr.bf16.mxu0 0
    %602 = vmatpush1.bf16.msra.mxu0 %v435
    %603 = vmatprep.subr.bf16.mxu0 0
    %604 = vmatpush1.bf16.msra.mxu0 %v436
    %605 = vmatprep.subr.bf16.mxu0 0
    %606 = vmatpush1.bf16.msra.mxu0 %v437
    %607 = vmatprep.subr.bf16.mxu0 0
    %608 = vmatpush1.bf16.msra.mxu0 %v438
    %609 = vmatprep.subr.bf16.mxu0 0
    %610 = vmatpush1.bf16.msra.mxu0 %v439
    %611 = vmatprep.subr.bf16.mxu0 0
    %612 = vmatpush1.bf16.msra.mxu0 %v440
    %613 = vmatprep.subr.bf16.mxu0 0
    %614 = vmatpush1.bf16.msra.mxu0 %v441
    %615 = vmatprep.mubr.bf16.mxu0 %v30
    %616 = vmatmul.mubr.bf16.gmra.mrb[0].mxu0 %v29
    %v617 = vpop.f32.mrb[0].mxu0
    %v618 = vadd.f32 %v578, %v617
    %v619 = vpop.f32.mrb[0].mxu0
    %v620 = vpop.f32.mrb[0].mxu0
    %v621 = vpop.f32.mrb[0].mxu0
    %622 = vdwg.mxu0
    %623 = vmatprep.subr.bf16.mxu0 0
    %624 = vmatpush1.bf16.msra.mxu0 %v442
    %625 = vmatprep.subr.bf16.mxu0 0
    %626 = vmatpush1.bf16.msra.mxu0 %v443
    %627 = vmatprep.subr.bf16.mxu0 0
    %628 = vmatpush1.bf16.msra.mxu0 %v444
    %629 = vmatprep.subr.bf16.mxu0 0
    %630 = vmatpush1.bf16.msra.mxu0 %v445
    %631 = vmatprep.subr.bf16.mxu0 0
    %632 = vmatpush1.bf16.msra.mxu0 %v446
    %633 = vmatprep.subr.bf16.mxu0 0
    %634 = vmatpush1.bf16.msra.mxu0 %v447
    %635 = vmatprep.subr.bf16.mxu0 0
    %636 = vmatpush1.bf16.msra.mxu0 %v448
    %637 = vmatprep.subr.bf16.mxu0 0
    %638 = vmatpush1.bf16.msra.mxu0 %v449
    %639 = vmatprep.subr.bf16.mxu0 0
    %640 = vmatpush1.bf16.msra.mxu0 %v450
    %641 = vmatprep.subr.bf16.mxu0 0
    %642 = vmatpush1.bf16.msra.mxu0 %v451
    %643 = vmatprep.subr.bf16.mxu0 0
    %644 = vmatpush1.bf16.msra.mxu0 %v452
    %645 = vmatprep.subr.bf16.mxu0 0
    %646 = vmatpush1.bf16.msra.mxu0 %v453
    %647 = vmatprep.subr.bf16.mxu0 0
    %648 = vmatpush1.bf16.msra.mxu0 %v454
    %649 = vmatprep.subr.bf16.mxu0 0
    %650 = vmatpush1.bf16.msra.mxu0 %v455
    %651 = vmatprep.subr.bf16.mxu0 0
    %652 = vmatpush1.bf16.msra.mxu0 %v456
    %653 = vmatprep.subr.bf16.mxu0 0
    %654 = vmatpush1.bf16.msra.mxu0 %v457
    %655 = vmatprep.mubr.bf16.mxu0 %v32
    %656 = vmatmul.mubr.bf16.gmra.mrb[0].mxu0 %v31
    %v657 = vpop.f32.mrb[0].mxu0
    %v658 = vadd.f32 %v618, %v657
    %v659 = vpop.f32.mrb[0].mxu0
    %v660 = vpop.f32.mrb[0].mxu0
    %v661 = vpop.f32.mrb[0].mxu0
    %662 = vdwg.mxu0
    %663 = vmatprep.subr.bf16.mxu0 0
    %664 = vmatpush1.bf16.msra.mxu0 %v458
    %665 = vmatprep.subr.bf16.mxu0 0
    %666 = vmatpush1.bf16.msra.mxu0 %v459
    %667 = vmatprep.subr.bf16.mxu0 0
    %668 = vmatpush1.bf16.msra.mxu0 %v460
    %669 = vmatprep.subr.bf16.mxu0 0
    %670 = vmatpush1.bf16.msra.mxu0 %v461
    %671 = vmatprep.subr.bf16.mxu0 0
    %672 = vmatpush1.bf16.msra.mxu0 %v462
    %673 = vmatprep.subr.bf16.mxu0 0
    %674 = vmatpush1.bf16.msra.mxu0 %v463
    %675 = vmatprep.subr.bf16.mxu0 0
    %676 = vmatpush1.bf16.msra.mxu0 %v464
    %677 = vmatprep.subr.bf16.mxu0 0
    %678 = vmatpush1.bf16.msra.mxu0 %v465
    %679 = vmatprep.subr.bf16.mxu0 0
    %680 = vmatpush1.bf16.msra.mxu0 %v466
    %681 = vmatprep.subr.bf16.mxu0 0
    %682 = vmatpush1.bf16.msra.mxu0 %v467
    %683 = vmatprep.subr.bf16.mxu0 0
    %684 = vmatpush1.bf16.msra.mxu0 %v468
    %685 = vmatprep.subr.bf16.mxu0 0
    %686 = vmatpush1.bf16.msra.mxu0 %v469
    %687 = vmatprep.subr.bf16.mxu0 0
    %688 = vmatpush1.bf16.msra.mxu0 %v470
    %689 = vmatprep.subr.bf16.mxu0 0
    %690 = vmatpush1.bf16.msra.mxu0 %v471
    %691 = vmatprep.subr.bf16.mxu0 0
    %692 = vmatpush1.bf16.msra.mxu0 %v541
    %693 = vmatprep.subr.bf16.mxu0 0
    %694 = vmatpush1.bf16.msra.mxu0 0
    %695 = vmatprep.mubr.bf16.mxu0 %v537
    %696 = vmatmul.mubr.bf16.gmra.mrb[0].mxu0 %v33
    %v697 = vpop.f32.mrb[0].mxu0
    %v698 = vadd.f32 %v658, %v697
    %v699 = vpop.f32.mrb[0].mxu0
    %v700 = vpop.f32.mrb[0].mxu0
    %v701 = vpop.f32.mrb[0].mxu0
    %702 = vdwg.mxu0
    %v703 = vld [vmem:[%s3] sm:$0x7]
    %vm704 = vcmask 261120
    %v705 = vsel %vm704, %v698, 0.0
    %v706 = vrot.slane %v705, 4
    %v707 = vadd.f32 %v705, %v706
    %v708 = vrot.slane %v707, 2
    %v709 = vadd.f32 %v707, %v708
    %v710 = vrot.slane %v709, 1
    %v711 = vadd.f32 %v709, %v710
    %v712 = vrcp.pop 8.0
    %v713 = vmul.f32 %v711, %v712
    %v714 = vsub.f32 %v698, %v713
    %v715 = vmul.f32 %v714, %v714
    %v716 = vsel %vm704, %v715, 0.0
    %v717 = vrot.slane %v716, 4
    %v718 = vadd.f32 %v716, %v717
    %v719 = vrot.slane %v718, 2
    %v720 = vadd.f32 %v718, %v719
    %v721 = vrot.slane %v720, 1
    %v722 = vadd.f32 %v720, %v721
    %v723 = vmul.f32 %v722, %v712
    %v724 = vadd.f32 %v723, 1e-05
    %v725 = vrsqrt.pop %v724
    %v726 = vmul.f32 %v714, %v725
    %v727 = vlaneseq
    %v728 = vshrl.u32 %v727, 7
    %v729 = vsub.s32 0, %v728
    %v730 = vrot.slane %v703, %v729
    %v731 = vmul.f32 %v726, %v730
    %v732 = vlaneseq
    %v733 = vshrl.u32 %v732, 7
    %v734 = vsub.s32 1, %v733
    %v735 = vrot.slane %v703, %v734
    %v736 = vadd.f32 %v731, %v735
    %v737 = vmax.f32 %v736, 0.0
    %v738 = vpack.c.bf16 %v737, %v737
    %v739 = vld [vmem:[%s2] sm:$0xf]
    %v740 = vld [vmem:[%s2 + $0x4] sm:$0xf]
    %v741 = vld [vmem:[%s2 + $0x8] sm:$0xf]
    %v742 = vld [vmem:[%s2 + $0xc] sm:$0xf]
    %v743 = vlaneseq
    %v744 = vshrl.u32 %v743, 7
    %v745 = vsub.s32 2, %v744
    %v746 = vrot.slane %v703, %v745
    %v751 = vunpack.c.l.b16 %v739
    %v752 = vunpack.c.l.b16 %v740
    %v753 = vunpack.c.l.b16 %v741
    %v754 = vunpack.c.l.b16 %v742
    %v755 = vpack.c.b16 %v752, %v751
    %v756 = vpack.c.b16 %v754, %v753
    %v760 = vsel %vm704, %v738, 0
    %762 = vmatprep.subr.bf16.mxu0 0
    %763 = vmatpush1.bf16.msra.mxu0 %v755
    %764 = vmatprep.subr.bf16.mxu0 0
    %765 = vmatpush1.bf16.msra.mxu0 %v756
    %766 = vmatprep.subr.bf16.mxu0 0
    %767 = vmatpush1.bf16.msra.mxu0 0
    %768 = vmatprep.subr.bf16.mxu0 0
    %769 = vmatpush1.bf16.msra.mxu0 0
    %770 = vmatprep.subr.bf16.mxu0 0
    %771 = vmatpush1.bf16.msra.mxu0 0
    %772 = vmatprep.subr.bf16.mxu0 0
    %773 = vmatpush1.bf16.msra.mxu0 0
    %774 = vmatprep.subr.bf16.mxu0 0
    %775 = vmatpush1.bf16.msra.mxu0 0
    %776 = vmatprep.subr.bf16.mxu0 0
    %777 = vmatpush1.bf16.msra.mxu0 0
    %778 = vmatprep.subr.bf16.mxu0 0
    %779 = vmatpush1.bf16.msra.mxu0 0
    %780 = vmatprep.subr.bf16.mxu0 0
    %781 = vmatpush1.bf16.msra.mxu0 0
    %782 = vmatprep.subr.bf16.mxu0 0
    %783 = vmatpush1.bf16.msra.mxu0 0
    %784 = vmatprep.subr.bf16.mxu0 0
    %785 = vmatpush1.bf16.msra.mxu0 0
    %786 = vmatprep.subr.bf16.mxu0 0
    %787 = vmatpush1.bf16.msra.mxu0 0
    %788 = vmatprep.subr.bf16.mxu0 0
    %789 = vmatpush1.bf16.msra.mxu0 0
    %790 = vmatprep.subr.bf16.mxu0 0
    %791 = vmatpush1.bf16.msra.mxu0 0
    %792 = vmatprep.subr.bf16.mxu0 0
    %793 = vmatpush1.bf16.msra.mxu0 0
    %794 = vmatprep.mubr.bf16.mxu0 0
    %795 = vmatmul.mubr.bf16.gmra.mrb[0].mxu0 %v760
    %v796 = vpop.f32.mrb[0].mxu0
    %v797 = vadd.f32 %v746, %v796
    %v798 = vpop.f32.mrb[0].mxu0
    %v799 = vpop.f32.mrb[0].mxu0
    %v800 = vpop.f32.mrb[0].mxu0
    %801 = vdwg.mxu0
    %vm802 = vcmask 523264
    %v803 = vsel %vm802, %v797, -inf
    %804 = vmax.xlane.f32.xlu0 %v803
    %v805 = vpop.xlane.xlu0 %804
    %v806 = vlaneseq
    %v807 = vand.u32 %v806, 127
    %vm808 = vcmp.eq.f32.partialorder %v797, %v805
    %v809 = vsel %vm808, %v807, 64
    %v810 = vsel %vm802, %v809, 2147483647
    %v811 = vand.u32 %v810, 65535
    %v812 = vshra.s32 %v810, 16
    %v813 = vcvt.s32.f32 %v811
    %v814 = vcvt.s32.f32 %v812
    %815 = vmin.xlane.f32.xlu0 %v814
    %v816 = vpop.xlane.xlu0 %815
    %vm817 = vcmp.eq.f32.partialorder %v814, %v816
    %v818 = vsel %vm817, %v813, inf
    %819 = vmin.xlane.f32.xlu0 %v818
    %v820 = vpop.xlane.xlu0 %819
    %v821 = vcvt.f32.s32 %v820
    %v822 = vcvt.f32.s32 %v816
    %v823 = vshll.u32 %v822, 16
    %v824 = vadd.s32 %v823, %v821
    %vm825 = vcmp.eq.s32.totalorder %v807, %v824
    %v826 = vsel %vm825, 1, 0
    %827 = vst [vmem:[#allocation2] sm:$0xff] %v826
    // Predicated region
    $region18: #{tpu_custom_call.1} parent=1 // pred_check
      _
    $region19: #{tpu_custom_call.1} parent=1 // pred_check_branch
      %829 = sbr.rel (0) target = $region21
    $region20: #{tpu_custom_call.1} parent=1 // pred_region
      %s831 = ssub.s32 128, 128
      %832 = vsyncadd [#allocation3], %s831
      %s834 = sshll.u32 [#allocation2], 4
      %s835 = int_to_ptr.vmem [resolvable:$true] %s834
      %837 = dma.vmem_to_hbm [thread:$0]  %s835, 128, %s4, [#allocation3]
    $region21: #{tpu_custom_call.1} parent=1 // pred_fallthru
      _
    // Predicated region
    $region22: #{tpu_custom_call.1} parent=1 // pred_check
      _
    $region23: #{tpu_custom_call.1} parent=1 // pred_check_branch
      %839 = sbr.rel (0) target = $region25
    $region24: #{tpu_custom_call.1} parent=1 // pred_region
      %840 = dma.done [#allocation3], 128
    $region25: #{tpu_custom_call.1} parent=1 // pred_fallthru
      _
    %841 = vsyncpa [#allocation3], 1

</llo_original>
